<compile_context>
chip_gen: v6e
topology: v6e:2x2x1
jax: 0.10.0
libtpu: 0.0.40
codegen_flags: <defaults>
</compile_context>

<pallas_src>
import functools
import math

import jax
import jax.numpy as jnp
from jax import lax
from jax.experimental import pallas as pl
from jax.experimental.pallas import tpu as pltpu


_VMEM_BUDGET = 24 * 1024 * 1024   # tile working set kept under this on all chips
_VMEM_LIMIT = 32 * 1024 * 1024    # explicit scoped-VMEM limit (safe on v5e/v6e/v7x)
_LANE = 128
_TOK_BLK = 128                    # tokens per grid step in the gather path


def _round_up(x, m):
    return ((x + m - 1) // m) * m


def _clamp_tile(dim, pref):
    return dim if dim <= pref else pref


# ----------------------------------------------------------------------------
# Continuous path: tiled matmul  (M, V) @ (V, E) -> (M, E)
# ----------------------------------------------------------------------------
def _linear_kernel_acc(x_ref, w_ref, o_ref, acc_ref):
    @pl.when(pl.program_id(2) == 0)
    def _init():
        acc_ref[...] = jnp.zeros_like(acc_ref)

    acc_ref[...] += jnp.dot(x_ref[...], w_ref[...],
                            preferred_element_type=jnp.float32)

    @pl.when(pl.program_id(2) == pl.num_programs(2) - 1)
    def _store():
        o_ref[...] = acc_ref[...].astype(o_ref.dtype)


def _linear_kernel_single(x_ref, w_ref, o_ref):
    # Whole contraction fits one K step: no accumulator scratch / RMW needed.
    o_ref[...] = jnp.dot(x_ref[...], w_ref[...],
                         preferred_element_type=jnp.float32).astype(o_ref.dtype)


def continuous_embedding_linear(x, weight, *, tm=None, tn=None, tk=None):
    """x: (..., V) float, weight: (V, E). Returns (..., E) = x @ weight."""
    V, E = weight.shape
    lead = x.shape[:-1]
    M = math.prod(lead) if lead else 1
    x2 = x.reshape(M, V)

    auto_mn = tm is None and tn is None
    # MXU-native tile defaults, clamped to the problem.
    tm = _clamp_tile(M, 256 if tm is None else tm)
    tn = _clamp_tile(E, 256 if tn is None else tn)
    tk = _clamp_tile(V, 512 if tk is None else tk)

    # v7x megacore: make sure there are >=2 blocks along a 'parallel' axis
    # when the problem is big enough to split (no effect on v5e/v6e).
    if auto_mn and pl.cdiv(M, tm) == 1 and pl.cdiv(E, tn) == 1:
        if E >= 2 * _LANE:
            tn = _LANE * pl.cdiv(pl.cdiv(E, 2), _LANE)
        elif M >= 2 * _LANE:
            tm = _LANE * pl.cdiv(pl.cdiv(M, 2), _LANE)

    # VMEM budget: double-buffered inputs + f32 acc + double-buffered output.
    xb, wb, ob = x2.dtype.itemsize, weight.dtype.itemsize, x2.dtype.itemsize

    def est(a, b, c):
        return 2 * a * c * xb + 2 * c * b * wb + a * b * 4 + 2 * a * b * ob

    while est(tm, tn, tk) > _VMEM_BUDGET and tk > _LANE:
        tk = max(_LANE, tk // 2)
    while est(tm, tn, tk) > _VMEM_BUDGET and tn > _LANE:
        tn = max(_LANE, tn // 2)
    while est(tm, tn, tk) > _VMEM_BUDGET and tm > _LANE:
        tm = max(_LANE, tm // 2)

    # cdiv-style grid: pad to tile multiples, slice the remainder off after.
    pm, pn, pk = _round_up(M, tm), _round_up(E, tn), _round_up(V, tk)
    if (pm, pk) != (M, V):
        x2 = jnp.pad(x2, ((0, pm - M), (0, pk - V)))
    w = weight
    if (pk, pn) != (V, E):
        w = jnp.pad(weight, ((0, pk - V), (0, pn - E)))

    nm, nn, nk = pm // tm, pn // tn, pk // tk

    if nk == 1:
        kernel = _linear_kernel_single
        scratch = []
    else:
        kernel = _linear_kernel_acc
        scratch = [pltpu.VMEM((tm, tn), jnp.float32)]

    out = pl.pallas_call(
        kernel,
        out_shape=jax.ShapeDtypeStruct((pm, pn), x.dtype),
        grid_spec=pltpu.PrefetchScalarGridSpec(
            num_scalar_prefetch=0,
            grid=(nm, nn, nk),
            in_specs=[
                pl.BlockSpec((tm, tk), lambda i, j, k: (i, k)),
                pl.BlockSpec((tk, tn), lambda i, j, k: (k, j)),
            ],
            out_specs=pl.BlockSpec((tm, tn), lambda i, j, k: (i, j)),
            scratch_shapes=scratch,
        ),
        compiler_params=pltpu.CompilerParams(
            dimension_semantics=("parallel", "parallel", "arbitrary"),
            vmem_limit_bytes=_VMEM_LIMIT,
        ),
    )(x2, w)

    if (pm, pn) != (M, E):
        out = out[:M, :E]
    return out.reshape(*lead, E)


# ----------------------------------------------------------------------------
# Discrete path: embedding gather  weight[ids]  as one-hot(ids) @ weight
# ----------------------------------------------------------------------------
def _gather_kernel_acc(idx_ref, w_ref, o_ref, acc_ref, *, tv):
    @pl.when(pl.program_id(2) == 0)
    def _init():
        acc_ref[...] = jnp.zeros_like(acc_ref)

    ids = idx_ref[...]                                          # (TOK_BLK, 1) int32
    base = pl.program_id(2) * tv
    col = lax.broadcasted_iota(jnp.int32, (_TOK_BLK, tv), 1) + base
    onehot = (col == ids).astype(w_ref.dtype)                   # (TOK_BLK, tv)
    acc_ref[...] += jnp.dot(onehot, w_ref[...],
                            preferred_element_type=jnp.float32)

    @pl.when(pl.program_id(2) == pl.num_programs(2) - 1)
    def _store():
        o_ref[...] = acc_ref[...].astype(o_ref.dtype)


def _gather_kernel_single(idx_ref, w_ref, o_ref, *, tv):
    ids = idx_ref[...]                                          # (TOK_BLK, 1) int32
    col = lax.broadcasted_iota(jnp.int32, (_TOK_BLK, tv), 1)
    onehot = (col == ids).astype(w_ref.dtype)
    o_ref[...] = jnp.dot(onehot, w_ref[...],
                         preferred_element_type=jnp.float32).astype(o_ref.dtype)


def continuous_embedding_lookup(ids, weight, *, tv=None, te=None):
    """ids: int array shape (...) with values in [0, V). Returns (..., E).

    128 tokens per grid step; the gather is a one-hot(ids) @ weight MXU matmul,
    so stores are full lane-dense tiles and out-of-range ids produce zero rows
    instead of unchecked VMEM reads.
    """
    V, E = weight.shape
    lead = ids.shape
    T = math.prod(lead) if lead else 1
    ids_flat = ids.reshape(T).astype(jnp.int32)

    Tp = _round_up(max(T, 1), _TOK_BLK)
    if Tp != T:
        ids_flat = jnp.pad(ids_flat, (0, Tp - T))   # padded tokens -> row 0, sliced off
    ids2 = ids_flat.reshape(Tp, 1)

    tv = _clamp_tile(V, 512 if tv is None else tv)
    te = _clamp_tile(E, 256 if te is None else te)

    wb = ob = weight.dtype.itemsize

    def est(a, b):
        return 2 * a * b * wb + _TOK_BLK * b * 4 + 2 * _TOK_BLK * b * ob

    while est(tv, te) > _VMEM_BUDGET and tv > _LANE:
        tv = max(_LANE, tv // 2)
    while est(tv, te) > _VMEM_BUDGET and te > _LANE:
        te = max(_LANE, te // 2)

    pv, pe = _round_up(V, tv), _round_up(E, te)
    w = weight
    if (pv, pe) != (V, E):
        w = jnp.pad(weight, ((0, pv - V), (0, pe - E)))

    nt, ne, nv = Tp // _TOK_BLK, pe // te, pv // tv

    if nv == 1:
        kernel = functools.partial(_gather_kernel_single, tv=tv)
        scratch = []
    else:
        kernel = functools.partial(_gather_kernel_acc, tv=tv)
        scratch = [pltpu.VMEM((_TOK_BLK, te), jnp.float32)]

    # TODO(synk): for very large tables (V*E >> VMEM) an HBM-resident weight
    # with DMA row gathers (memory_space=pl.ANY + make_async_copy) would avoid
    # streaming every V tile per token block; unnecessary at these shapes.
    out = pl.pallas_call(
        kernel,
        out_shape=jax.ShapeDtypeStruct((Tp, pe), weight.dtype),
        grid_spec=pltpu.PrefetchScalarGridSpec(
            num_scalar_prefetch=0,
            grid=(nt, ne, nv),
            in_specs=[
                pl.BlockSpec((_TOK_BLK, 1), lambda i, j, k: (i, 0)),
                pl.BlockSpec((tv, te), lambda i, j, k: (k, j)),
            ],
            out_specs=pl.BlockSpec((_TOK_BLK, te), lambda i, j, k: (i, j)),
            scratch_shapes=scratch,
        ),
        compiler_params=pltpu.CompilerParams(
            dimension_semantics=("parallel", "parallel", "arbitrary"),
            vmem_limit_bytes=_VMEM_LIMIT,
        ),
    )(ids2, w)

    if (Tp, pe) != (T, E):
        out = out[:T, :E]
    return out.reshape(*lead, E)


# ----------------------------------------------------------------------------
# Module-equivalent wrapper
# ----------------------------------------------------------------------------
class ContinuousEmbedding:
    def __init__(self, num_embeddings, embedding_dim, padding_idx, key=None,
                 _weight=None):
        self.num_embeddings = num_embeddings
        self.embedding_dim = embedding_dim
        self.padding_idx = padding_idx
        if _weight is None:
            assert key is not None
            w = jax.random.normal(key, (num_embeddings, embedding_dim),
                                  jnp.float32)
        else:
            assert _weight.shape == (num_embeddings, embedding_dim)
            w = jnp.asarray(_weight)
        # PyTorch re-zeros the padding row every forward; the JAX weight is
        # immutable, so zeroing it once when the weight is set is equivalent
        # and avoids a full (V, E) HBM copy per call.
        self.weight = self._zero_pad_row(w)

    def _zero_pad_row(self, w):
        if self.padding_idx is not None:
            w = w.at[self.padding_idx].set(0.0)
        return w

    def set_weight(self, w):
        self.weight = self._zero_pad_row(jnp.asarray(w))

    @property
    def embedding_size(self):
        return self.embedding_dim

    def __call__(self, x):
        discrete = x.ndim <= 2
        if discrete:
            return continuous_embedding_lookup(x, self.weight)
        return continuous_embedding_linear(x, self.weight)


if __name__ == "__main__":
    key = jax.random.PRNGKey(0)
    k_w, k_x, k_ids, k_x2 = jax.random.split(key, 4)

    V, E = 256, 128          # num_embeddings, embedding_dim
    B, S = 2, 8
    padding_idx = 0

    emb = ContinuousEmbedding(V, E, padding_idx, key=k_w)
    w_ref = emb.weight       # padding row already zeroed

    # --- continuous path: (B, S, V) float -> (B, S, E) via x @ weight --------
    x_cont = jax.random.normal(k_x, (B, S, V), jnp.float32)
    y_cont = jax.block_until_ready(emb(x_cont))
    y_cont_ref = jnp.einsum("bsv,ve->bse", x_cont, w_ref)
    assert y_cont.shape == (B, S, E)
    assert jnp.allclose(y_cont, y_cont_ref, atol=1e-4, rtol=1e-4)

    # force the multi-K-step accumulator path
    y_cont2 = jax.block_until_ready(
        continuous_embedding_linear(x_cont, w_ref, tm=8, tn=128, tk=128))
    assert jnp.allclose(y_cont2, y_cont_ref, atol=1e-4, rtol=1e-4)

    # non-multiple leading shape exercises the pad/slice remainder handling
    x_odd = jax.random.normal(k_x2, (3, 5, V), jnp.float32)
    y_odd = jax.block_until_ready(emb(x_odd))
    assert jnp.allclose(y_odd, jnp.einsum("bsv,ve->bse", x_odd, w_ref),
                        atol=1e-4, rtol=1e-4)

    # --- discrete path: (B, S) int ids -> (B, S, E) via weight[ids] ----------
    x_disc = jax.random.randint(k_ids, (B, S), 0, V, dtype=jnp.int32)
    x_disc = x_disc.at[0, 0].set(padding_idx)  # exercise padding row
    y_disc = jax.block_until_ready(emb(x_disc))
    y_disc_ref = w_ref[x_disc]
    assert y_disc.shape == (B, S, E)
    assert jnp.allclose(y_disc, y_disc_ref)
    assert jnp.all(y_disc[0, 0] == 0.0)

    # force the V-tiled accumulator gather path
    y_disc2 = jax.block_until_ready(
        continuous_embedding_lookup(x_disc, w_ref, tv=128, te=128))
    assert jnp.allclose(y_disc2, y_disc_ref)

    print("KERNEL_OK")
</pallas_src>

<mosaic_0001>
module attributes {stable_mosaic.version = 11 : i64} {
  func.func @_linear_kernel_single(%arg0: i32, %arg1: i32, %arg2: i32, %arg3: memref<16x256xf32, #tpu.memory_space<vmem>>, %arg4: memref<256x128xf32, #tpu.memory_space<vmem>>, %arg5: memref<16x128xf32, #tpu.memory_space<vmem>>) attributes {dimension_semantics = [#tpu.dimension_semantics<parallel>, #tpu.dimension_semantics<parallel>, #tpu.dimension_semantics<arbitrary>], iteration_bounds = array<i64: 1, 1, 1>, scalar_prefetch = 0 : i64, scratch_operands = 0 : i64, tpu.core_type = #tpu.core_type<tc>, window_params = [{transform_indices = @transform_0, window_bounds = array<i64: 16, 256>}, {transform_indices = @transform_1, window_bounds = array<i64: 256, 128>}, {transform_indices = @transform_2, window_bounds = array<i64: 16, 128>}]} {
    %c0 = arith.constant 0 : index
    %c0_0 = arith.constant 0 : index
    %0 = vector.load %arg3[%c0, %c0_0] : memref<16x256xf32, #tpu.memory_space<vmem>>, vector<16x256xf32>
    %c0_1 = arith.constant 0 : index
    %c0_2 = arith.constant 0 : index
    %1 = vector.load %arg4[%c0_1, %c0_2] : memref<256x128xf32, #tpu.memory_space<vmem>>, vector<256x128xf32>
    %cst = arith.constant dense<0.000000e+00> : vector<16x128xf32>
    %2 = tpu.matmul %0, %1, %cst {dimension_numbers = #tpu.dot_dimension_numbers<[1], [0], [0], [1], [0, 0, 1, 1], [], []>} : vector<16x256xf32>, vector<256x128xf32>, vector<16x128xf32> -> vector<16x128xf32>
    %c0_3 = arith.constant 0 : index
    %c0_4 = arith.constant 0 : index
    %3 = vector.load %arg5[%c0_3, %c0_4] : memref<16x128xf32, #tpu.memory_space<vmem>>, vector<16x128xf32>
    tpu.vector_store %arg5[%c0_3, %c0_4], %2 {strides = array<i32>} : memref<16x128xf32, #tpu.memory_space<vmem>>, vector<16x128xf32>,
    return
  }
  func.func @transform_0(%arg0: i32, %arg1: i32, %arg2: i32) -> (i32, i32) {
    %c0_i32 = arith.constant 0 : i32
    return %arg0, %arg2 : i32, i32
  }
  func.func @transform_1(%arg0: i32, %arg1: i32, %arg2: i32) -> (i32, i32) {
    %c0_i32 = arith.constant 0 : i32
    return %arg2, %arg1 : i32, i32
  }
  func.func @transform_2(%arg0: i32, %arg1: i32, %arg2: i32) -> (i32, i32) {
    %c0_i32 = arith.constant 0 : i32
    return %arg0, %arg1 : i32, i32
  }
}

</mosaic_0001>

<llo_original>
// kernel: tpu_custom_call.1
$region0: #{tpu_custom_call.1}
  #allocation0 [shape = 'u32[]', space=smem, size = 0x4, offset = 0x4, fixed_abs, tag = 'smem constant byte address 0x4 - core index']
  #allocation1 [shape = 'u32[144,128]{1,0:T(1,128)}', space=vmem, size = 0x12000, scoped, tag = 'internal scratch']
  %s0 = inlined_call_operand.hbm [shape: f32[16,256], index: 0, kind: input, shape index: {}]
  %s1 = inlined_call_operand.hbm [shape: f32[256,128], index: 1, kind: input, shape index: {}]
  %s2 = inlined_call_operand.hbm [shape: f32[16,128], index: 2, kind: output, shape index: {}]
  %s3 = sld [smem:[#allocation0]]
  $region26: #{tpu_custom_call.1} parent=0
    _
  %s5 = ssub.s32 1, %s3
  %s6 = scalar_select 0, %s5, %s3
  $region1: #{tpu_custom_call.1} parent=0
    #allocation2 [shape = 'u8[16384]{0}', space=vmem, size = 0x4000, scoped, tag = 'input window, operand 0, single buffered']
    #allocation3 [shape = 's32[1]{0}', space=sflag, size = 0x4, scoped, tag = 'scoped memory for tpu_custom_call.1']
    #allocation4 [shape = 's32[1]{0}', space=sflag, size = 0x4, scoped, tag = 'scoped memory for tpu_custom_call.1']
    #allocation5 [shape = 'u8[131072]{0}', space=vmem, size = 0x20000, scoped, tag = 'input window, operand 1, single buffered']
    #allocation6 [shape = 's32[1]{0}', space=sflag, size = 0x4, scoped, tag = 'scoped memory for tpu_custom_call.1']
    #allocation7 [shape = 'u8[8192]{0}', space=vmem, size = 0x2000, scoped, tag = 'output window, operand 0, single buffered']
    %7 = vsyncpa [#allocation3], 0
    %8 = vsyncpa [#allocation6], 0
    %9 = vsyncpa [#allocation4], 0
    // Predicated region
    $region2: #{tpu_custom_call.1} parent=1 // pred_check
      _
    $region3: #{tpu_custom_call.1} parent=1 // pred_check_branch
      %11 = sbr.rel (0) target = $region5
    $region4: #{tpu_custom_call.1} parent=1 // pred_region
      %s13 = ssub.s32 512, 512
      %14 = vsyncadd [#allocation3], %s13
      %s15 = sshll.u32 [#allocation2], 4
      %s16 = int_to_ptr.vmem [resolvable:$true] %s15
      %21 = dma.hbm_to_vmem [thread:$0]  %s0, 512, %s16, [#allocation3], 256, 256, 16
    $region5: #{tpu_custom_call.1} parent=1 // pred_fallthru
      _
    // Predicated region
    $region6: #{tpu_custom_call.1} parent=1 // pred_check
      _
    $region7: #{tpu_custom_call.1} parent=1 // pred_check_branch
      %23 = sbr.rel (0) target = $region9
    $region8: #{tpu_custom_call.1} parent=1 // pred_region
      %s25 = ssub.s32 4096, 4096
      %26 = vsyncadd [#allocation6], %s25
      %s27 = sshll.u32 [#allocation5], 4
      %s28 = int_to_ptr.vmem [resolvable:$true] %s27
      %33 = dma.hbm_to_vmem [thread:$0]  %s1, 4096, %s28, [#allocation6], 128, 128, 8
    $region9: #{tpu_custom_call.1} parent=1 // pred_fallthru
      _
    // Predicated region
    $region10: #{tpu_custom_call.1} parent=1 // pred_check
      _
    $region11: #{tpu_custom_call.1} parent=1 // pred_check_branch
      %35 = sbr.rel (0) target = $region13
    $region12: #{tpu_custom_call.1} parent=1 // pred_region
      %36 = dma.done [#allocation3], 512
    $region13: #{tpu_custom_call.1} parent=1 // pred_fallthru
      _
    // Predicated region
    $region14: #{tpu_custom_call.1} parent=1 // pred_check
      _
    $region15: #{tpu_custom_call.1} parent=1 // pred_check_branch
      %38 = sbr.rel (0) target = $region17
    $region16: #{tpu_custom_call.1} parent=1 // pred_region
      %39 = dma.done [#allocation6], 4096
    $region17: #{tpu_custom_call.1} parent=1 // pred_fallthru
      _
    %v40 = vld [vmem:[#allocation2] sm:$0xff]
    %v41 = vld [vmem:[#allocation2 + $0x8] sm:$0xff]
    %v42 = vld [vmem:[#allocation2 + $0x10] sm:$0xff]
    %v43 = vld [vmem:[#allocation2 + $0x18] sm:$0xff]
    %v44 = vld [vmem:[#allocation5] sm:$0xff]
    %v45 = vld [vmem:[#allocation5 + $0x8] sm:$0xff]
    %v46 = vld [vmem:[#allocation5 + $0x10] sm:$0xff]
    %v47 = vld [vmem:[#allocation5 + $0x18] sm:$0xff]
    %v48 = vld [vmem:[#allocation5 + $0x20] sm:$0xff]
    %v49 = vld [vmem:[#allocation5 + $0x28] sm:$0xff]
    %v50 = vld [vmem:[#allocation5 + $0x30] sm:$0xff]
    %v51 = vld [vmem:[#allocation5 + $0x38] sm:$0xff]
    %v52 = vld [vmem:[#allocation5 + $0x40] sm:$0xff]
    %v53 = vld [vmem:[#allocation5 + $0x48] sm:$0xff]
    %v54 = vld [vmem:[#allocation5 + $0x50] sm:$0xff]
    %v55 = vld [vmem:[#allocation5 + $0x58] sm:$0xff]
    %v56 = vld [vmem:[#allocation5 + $0x60] sm:$0xff]
    %v57 = vld [vmem:[#allocation5 + $0x68] sm:$0xff]
    %v58 = vld [vmem:[#allocation5 + $0x70] sm:$0xff]
    %v59 = vld [vmem:[#allocation5 + $0x78] sm:$0xff]
    %v60 = vld [vmem:[#allocation5 + $0x80] sm:$0xff]
    %v61 = vld [vmem:[#allocation5 + $0x88] sm:$0xff]
    %v62 = vld [vmem:[#allocation5 + $0x90] sm:$0xff]
    %v63 = vld [vmem:[#allocation5 + $0x98] sm:$0xff]
    %v64 = vld [vmem:[#allocation5 + $0xa0] sm:$0xff]
    %v65 = vld [vmem:[#allocation5 + $0xa8] sm:$0xff]
    %v66 = vld [vmem:[#allocation5 + $0xb0] sm:$0xff]
    %v67 = vld [vmem:[#allocation5 + $0xb8] sm:$0xff]
    %v68 = vld [vmem:[#allocation5 + $0xc0] sm:$0xff]
    %v69 = vld [vmem:[#allocation5 + $0xc8] sm:$0xff]
    %v70 = vld [vmem:[#allocation5 + $0xd0] sm:$0xff]
    %v71 = vld [vmem:[#allocation5 + $0xd8] sm:$0xff]
    %v72 = vld [vmem:[#allocation5 + $0xe0] sm:$0xff]
    %v73 = vld [vmem:[#allocation5 + $0xe8] sm:$0xff]
    %v74 = vld [vmem:[#allocation5 + $0xf0] sm:$0xff]
    %v75 = vld [vmem:[#allocation5 + $0xf8] sm:$0xff]
    %76 = vmatprep.subr.mxu0 0.0
    %77 = vmatpush1.msra.mxu0 %v59
    %78 = vmatprep.subr.mxu0 0.0
    %79 = vmatpush1.msra.mxu0 %v58
    %80 = vmatprep.subr.mxu0 0.0
    %81 = vmatpush1.msra.mxu0 %v57
    %82 = vmatprep.subr.mxu0 0.0
    %83 = vmatpush1.msra.mxu0 %v56
    %84 = vmatprep.subr.mxu0 0.0
    %85 = vmatpush1.msra.mxu0 %v55
    %86 = vmatprep.subr.mxu0 0.0
    %87 = vmatpush1.msra.mxu0 %v54
    %88 = vmatprep.subr.mxu0 0.0
    %89 = vmatpush1.msra.mxu0 %v53
    %90 = vmatprep.subr.mxu0 0.0
    %91 = vmatpush1.msra.mxu0 %v52
    %92 = vmatprep.subr.mxu0 0.0
    %93 = vmatpush1.msra.mxu0 %v51
    %94 = vmatprep.subr.mxu0 0.0
    %95 = vmatpush1.msra.mxu0 %v50
    %96 = vmatprep.subr.mxu0 0.0
    %97 = vmatpush1.msra.mxu0 %v49
    %98 = vmatprep.subr.mxu0 0.0
    %99 = vmatpush1.msra.mxu0 %v48
    %100 = vmatprep.subr.mxu0 0.0
    %101 = vmatpush1.msra.mxu0 %v47
    %102 = vmatprep.subr.mxu0 0.0
    %103 = vmatpush1.msra.mxu0 %v46
    %104 = vmatprep.subr.mxu0 0.0
    %105 = vmatpush1.msra.mxu0 %v45
    %106 = vmatprep.subr.mxu0 0.0
    %107 = vmatpush1.msra.mxu0 %v44
    %108 = vmatprep.subr.mxu0 0.0
    %109 = vmatpush2.msra.mxu0 %v75
    %110 = vmatprep.subr.mxu0 0.0
    %111 = vmatpush2.msra.mxu0 %v74
    %112 = vmatprep.subr.mxu0 0.0
    %113 = vmatpush2.msra.mxu0 %v73
    %114 = vmatprep.subr.mxu0 0.0
    %115 = vmatpush2.msra.mxu0 %v72
    %116 = vmatprep.subr.mxu0 0.0
    %117 = vmatpush2.msra.mxu0 %v71
    %118 = vmatprep.subr.mxu0 0.0
    %119 = vmatpush2.msra.mxu0 %v70
    %120 = vmatprep.subr.mxu0 0.0
    %121 = vmatpush2.msra.mxu0 %v69
    %122 = vmatprep.subr.mxu0 0.0
    %123 = vmatpush2.msra.mxu0 %v68
    %124 = vmatprep.subr.mxu0 0.0
    %125 = vmatpush2.msra.mxu0 %v67
    %126 = vmatprep.subr.mxu0 0.0
    %127 = vmatpush2.msra.mxu0 %v66
    %128 = vmatprep.subr.mxu0 0.0
    %129 = vmatpush2.msra.mxu0 %v65
    %130 = vmatprep.subr.mxu0 0.0
    %131 = vmatpush2.msra.mxu0 %v64
    %132 = vmatprep.subr.mxu0 0.0
    %133 = vmatpush2.msra.mxu0 %v63
    %134 = vmatprep.subr.mxu0 0.0
    %135 = vmatpush2.msra.mxu0 %v62
    %136 = vmatprep.subr.mxu0 0.0
    %137 = vmatpush2.msra.mxu0 %v61
    %138 = vmatprep.subr.mxu0 0.0
    %139 = vmatpush2.msra.mxu0 %v60
    %140 = vmatprep.mubr.f32.mxu0 %v41
    %141 = vmatmul.mubr.f32.gmra.mxu0 %v40
    %v142 = vpop.f32.mrf.mxu0
    %v143 = vadd.f32 0.0, %v142
    %v144 = vpop.f32.mrf.mxu0
    %145 = vmatprep.mubr.f32.mxu0 %v43
    %146 = vmatmul.mubr.f32.gmra.mxu0 %v42
    %v147 = vpop.f32.mrf.mxu0
    %v148 = vadd.f32 0.0, %v147
    %v149 = vpop.f32.mrf.mxu0
    %150 = vdwg.mxu0
    %151 = vst [vmem:[#allocation7] sm:$0xff] %v143
    %152 = vst [vmem:[#allocation7 + $0x8] sm:$0xff] %v148
    // Predicated region
    $region18: #{tpu_custom_call.1} parent=1 // pred_check
      _
    $region19: #{tpu_custom_call.1} parent=1 // pred_check_branch
      %154 = sbr.rel (0) target = $region21
    $region20: #{tpu_custom_call.1} parent=1 // pred_region
      %s156 = ssub.s32 256, 256
      %157 = vsyncadd [#allocation4], %s156
      %s158 = sshll.u32 [#allocation7], 4
      %s159 = int_to_ptr.vmem [resolvable:$true] %s158
      %164 = dma.vmem_to_hbm [thread:$0]  %s159, 256, %s2, [#allocation4], 128, 128, 8
    $region21: #{tpu_custom_call.1} parent=1 // pred_fallthru
      _
    // Predicated region
    $region22: #{tpu_custom_call.1} parent=1 // pred_check
      _
    $region23: #{tpu_custom_call.1} parent=1 // pred_check_branch
      %166 = sbr.rel (0) target = $region25
    $region24: #{tpu_custom_call.1} parent=1 // pred_region
      %167 = dma.done [#allocation4], 256
    $region25: #{tpu_custom_call.1} parent=1 // pred_fallthru
      _
    %168 = vsyncpa [#allocation3], 1
    %169 = vsyncpa [#allocation6], 1
    %170 = vsyncpa [#allocation4], 1

</llo_original>
